<compile_context>
chip_gen: v7x
topology: tpu7x:2x2x1
jax: 0.10.0
libtpu: 0.0.40
codegen_flags: <defaults>
</compile_context>

<pallas_src>
import functools

import numpy as np
import jax
import jax.numpy as jnp
from jax.experimental import pallas as pl
from jax.experimental.pallas import tpu as pltpu


def _sum_all(x):
    # Full reduction of a 2-D array, kept as a (1, 1) value (Mosaic-friendly).
    return jnp.sum(jnp.sum(x, axis=1, keepdims=True), axis=0, keepdims=True)


# ----------------------------------------------------------------------------
# Pallas kernel: per-grid-step partial sums of the edge losses.
# ----------------------------------------------------------------------------
def _edge_loss_kernel(p_ref, t_ref, o_ref, *, sobel_weight, laplacian_weight):
    Bt, C, H, W = p_ref.shape
    inv_c = 1.0 / C

    # Channel-mean ("grayscale"), accumulated in f32 regardless of input dtype.
    gp = p_ref[:, 0, :, :].astype(jnp.float32)
    gt = t_ref[:, 0, :, :].astype(jnp.float32)
    for c in range(1, C):
        gp = gp + p_ref[:, c, :, :].astype(jnp.float32)
        gt = gt + t_ref[:, c, :, :].astype(jnp.float32)
    gp = gp * inv_c
    gt = gt * inv_c

    # Stack pred and target grays along the (cheap, non-tiled) leading axis so
    # every VPU instruction below processes both images at once.
    g = jnp.concatenate([gp, gt], axis=0)            # (2*Bt, H, W), f32
    N = 2 * Bt

    zrow = jnp.zeros((N, 1, W), jnp.float32)
    zcol = jnp.zeros((N, H, 1), jnp.float32)

    # Zero-padded unit shifts: exactly conv2d's padding=1 border behavior.
    def at_ip1(x):   # out[:, i, :] = x[:, i+1, :]   (0 at i = H-1)
        return jnp.concatenate([x[:, 1:, :], zrow], axis=1)

    def at_im1(x):   # out[:, i, :] = x[:, i-1, :]   (0 at i = 0)
        return jnp.concatenate([zrow, x[:, :H - 1, :]], axis=1)

    def at_jp1(x):   # out[..., j] = x[..., j+1]     (0 at j = W-1)
        return jnp.concatenate([x[:, :, 1:], zcol], axis=2)

    def at_jm1(x):   # out[..., j] = x[..., j-1]     (0 at j = 0)
        return jnp.concatenate([zcol, x[:, :, :W - 1]], axis=2)

    g_ip1 = at_ip1(g)
    g_im1 = at_im1(g)

    # Separable row (H-direction) passes.
    a_sm = g_im1 + 2.0 * g + g_ip1          # [ 1, 2, 1] along H (sobel_x row pass)
    a_dh = g_ip1 - g_im1                    # [-1, 0, 1] along H (sobel_y row pass)
    lap_h = 2.0 * g - g_im1 - g_ip1         # [-1, 2,-1] along H (laplacian row pass)

    # Column (W-direction) passes.
    ex = at_jp1(a_sm) - at_jm1(a_sm)                     # sobel_x
    ey = at_jm1(a_dh) + 2.0 * a_dh + at_jp1(a_dh)        # sobel_y
    lap = lap_h + 2.0 * g - at_jm1(g) - at_jp1(g)        # laplacian

    sob = jnp.sqrt(ex * ex + ey * ey)
    lab = jnp.abs(lap)

    # Leading-axis slices [0, Bt) are pred, [Bt, 2*Bt) are target.
    ds = jnp.abs(sob[:Bt] - sob[Bt:])                    # (Bt, H, W)
    dl = jnp.abs(lab[:Bt] - lab[Bt:])

    contrib = (sobel_weight * _sum_all(jnp.sum(ds, axis=0))
               + laplacian_weight * _sum_all(jnp.sum(dl, axis=0)))
    o_ref[0] = contrib                                   # (1, 1) partial sum


# ----------------------------------------------------------------------------
# Wrapper
# ----------------------------------------------------------------------------
def edge_preserving_loss(pred, target, loss_weight=1.0, sobel_weight=1.0,
                         laplacian_weight=0.5, images_per_step=None):
    assert pred.shape == target.shape and pred.ndim == 4
    B, C, H, W = pred.shape

    # Images per grid step: amortize fixed per-step cost / issue larger DMAs
    # for small images, but keep the parallel grid extent >= 2 when possible
    # (v7x has 2 TensorCores; "parallel" lets Mosaic shard the grid over them).
    if images_per_step is None:
        images_per_step = max(1, 128 // W) if W < 128 else 1
    bt = max(1, min(int(images_per_step), B))
    if B > 1 and pl.cdiv(B, bt) < 2:
        bt = pl.cdiv(B, 2)
    g_steps = pl.cdiv(B, bt)
    b_pad = g_steps * bt
    if b_pad != B:
        # Zero-padded images have identical (zero) pred/target edges -> they
        # contribute exactly zero to both L1 sums.
        pad = ((0, b_pad - B), (0, 0), (0, 0), (0, 0))
        pred = jnp.pad(pred, pad)
        target = jnp.pad(target, pad)

    kernel = functools.partial(
        _edge_loss_kernel,
        sobel_weight=float(sobel_weight),
        laplacian_weight=float(laplacian_weight),
    )

    itemsize = jnp.dtype(pred.dtype).itemsize
    cost = pl.CostEstimate(
        flops=int(2 * b_pad * H * W * (C + 30)),
        transcendentals=int(2 * b_pad * H * W),
        bytes_accessed=int(2 * b_pad * C * H * W * itemsize + g_steps * 4),
    )

    partial_sums = pl.pallas_call(
        kernel,
        out_shape=jax.ShapeDtypeStruct((g_steps, 1, 1), jnp.float32),
        grid=(g_steps,),
        in_specs=[
            pl.BlockSpec((bt, C, H, W), lambda b: (b, 0, 0, 0)),
            pl.BlockSpec((bt, C, H, W), lambda b: (b, 0, 0, 0)),
        ],
        out_specs=pl.BlockSpec((1, 1, 1), lambda b: (b, 0, 0)),
        compiler_params=pltpu.CompilerParams(
            dimension_semantics=("parallel",)),
        cost_estimate=cost,
    )(pred, target)

    # Both L1 means are over B*1*H*W elements (true B; padded images add zero).
    return (jnp.sum(partial_sums) / (B * H * W)) * loss_weight
    # TODO(synk): the torch forward's try/except fallback to 0.0 is host-side
    # error handling with no kernel equivalent; intentionally not reproduced.


# ----------------------------------------------------------------------------
# Pure-numpy (float64) reference for a numerical sanity check.
# ----------------------------------------------------------------------------
def _edge_preserving_loss_ref(pred, target, loss_weight=1.0, sobel_weight=1.0,
                              laplacian_weight=0.5):
    p = np.asarray(pred, np.float64)
    t = np.asarray(target, np.float64)

    sx = np.array([[-1, 0, 1], [-2, 0, 2], [-1, 0, 1]], np.float64)
    sy = np.array([[-1, -2, -1], [0, 0, 0], [1, 2, 1]], np.float64)
    lp = np.array([[0, -1, 0], [-1, 4, -1], [0, -1, 0]], np.float64)

    def cross_corr(g, k):
        B, H, W = g.shape
        gp = np.pad(g, ((0, 0), (1, 1), (1, 1)))
        out = np.zeros_like(g)
        for di in range(3):
            for dj in range(3):
                out += k[di, dj] * gp[:, di:di + H, dj:dj + W]
        return out

    def edges(x):
        g = x.mean(axis=1)
        ex = cross_corr(g, sx)
        ey = cross_corr(g, sy)
        return np.sqrt(ex ** 2 + ey ** 2), np.abs(cross_corr(g, lp))

    ps, plap = edges(p)
    ts, tlap = edges(t)
    sobel_loss = np.mean(np.abs(ps - ts))
    lap_loss = np.mean(np.abs(plap - tlap))
    return (sobel_weight * sobel_loss + laplacian_weight * lap_loss) * loss_weight


if __name__ == "__main__":
    key = jax.random.PRNGKey(0)
    k1, k2 = jax.random.split(key)
    pred = jax.random.uniform(k1, (2, 4, 16, 16), dtype=jnp.float32)
    target = jax.random.uniform(k2, (2, 4, 16, 16), dtype=jnp.float32)

    loss = edge_preserving_loss(pred, target)
    loss = jax.block_until_ready(loss)

    ref = _edge_preserving_loss_ref(np.asarray(pred), np.asarray(target))
    np.testing.assert_allclose(np.asarray(loss), ref, rtol=1e-4, atol=1e-6)
    print("KERNEL_OK")
</pallas_src>

<mosaic_0001>
module attributes {stable_mosaic.version = 11 : i64} {
  func.func @_edge_loss_kernel(%arg0: i32, %arg1: memref<1x4x16x16xf32, #tpu.memory_space<vmem>>, %arg2: memref<1x4x16x16xf32, #tpu.memory_space<vmem>>, %arg3: memref<1x1x1xf32, #tpu.memory_space<vmem>>) attributes {dimension_semantics = [#tpu.dimension_semantics<parallel>], iteration_bounds = array<i64: 2>, scalar_prefetch = 0 : i64, scratch_operands = 0 : i64, tpu.core_type = #tpu.core_type<tc>, window_params = [{transform_indices = @transform_0, window_bounds = array<i64: 1, 4, 16, 16>}, {transform_indices = @transform_1, window_bounds = array<i64: 1, 4, 16, 16>}, {transform_indices = @transform_2, window_bounds = array<i64: 1, 1, 1>}]} {
    %c0 = arith.constant 0 : index
    %c0_0 = arith.constant 0 : index
    %c0_1 = arith.constant 0 : index
    %c0_2 = arith.constant 0 : index
    %0 = vector.load %arg1[%c0, %c0_0, %c0_1, %c0_2] : memref<1x4x16x16xf32, #tpu.memory_space<vmem>>, vector<1x1x16x16xf32>
    %1 = vector.shape_cast %0 : vector<1x1x16x16xf32> to vector<1x16x16xf32>
    %c0_3 = arith.constant 0 : index
    %c0_4 = arith.constant 0 : index
    %c0_5 = arith.constant 0 : index
    %c0_6 = arith.constant 0 : index
    %2 = vector.load %arg2[%c0_3, %c0_4, %c0_5, %c0_6] : memref<1x4x16x16xf32, #tpu.memory_space<vmem>>, vector<1x1x16x16xf32>
    %3 = vector.shape_cast %2 : vector<1x1x16x16xf32> to vector<1x16x16xf32>
    %c0_7 = arith.constant 0 : index
    %c1 = arith.constant 1 : index
    %c0_8 = arith.constant 0 : index
    %c0_9 = arith.constant 0 : index
    %4 = vector.load %arg1[%c0_7, %c1, %c0_8, %c0_9] : memref<1x4x16x16xf32, #tpu.memory_space<vmem>>, vector<1x1x16x16xf32>
    %5 = vector.shape_cast %4 : vector<1x1x16x16xf32> to vector<1x16x16xf32>
    %6 = arith.addf %1, %5 : vector<1x16x16xf32>
    %c0_10 = arith.constant 0 : index
    %c1_11 = arith.constant 1 : index
    %c0_12 = arith.constant 0 : index
    %c0_13 = arith.constant 0 : index
    %7 = vector.load %arg2[%c0_10, %c1_11, %c0_12, %c0_13] : memref<1x4x16x16xf32, #tpu.memory_space<vmem>>, vector<1x1x16x16xf32>
    %8 = vector.shape_cast %7 : vector<1x1x16x16xf32> to vector<1x16x16xf32>
    %9 = arith.addf %3, %8 : vector<1x16x16xf32>
    %c0_14 = arith.constant 0 : index
    %c2 = arith.constant 2 : index
    %c0_15 = arith.constant 0 : index
    %c0_16 = arith.constant 0 : index
    %10 = vector.load %arg1[%c0_14, %c2, %c0_15, %c0_16] : memref<1x4x16x16xf32, #tpu.memory_space<vmem>>, vector<1x1x16x16xf32>
    %11 = vector.shape_cast %10 : vector<1x1x16x16xf32> to vector<1x16x16xf32>
    %12 = arith.addf %6, %11 : vector<1x16x16xf32>
    %c0_17 = arith.constant 0 : index
    %c2_18 = arith.constant 2 : index
    %c0_19 = arith.constant 0 : index
    %c0_20 = arith.constant 0 : index
    %13 = vector.load %arg2[%c0_17, %c2_18, %c0_19, %c0_20] : memref<1x4x16x16xf32, #tpu.memory_space<vmem>>, vector<1x1x16x16xf32>
    %14 = vector.shape_cast %13 : vector<1x1x16x16xf32> to vector<1x16x16xf32>
    %15 = arith.addf %9, %14 : vector<1x16x16xf32>
    %c0_21 = arith.constant 0 : index
    %c3 = arith.constant 3 : index
    %c0_22 = arith.constant 0 : index
    %c0_23 = arith.constant 0 : index
    %16 = vector.load %arg1[%c0_21, %c3, %c0_22, %c0_23] : memref<1x4x16x16xf32, #tpu.memory_space<vmem>>, vector<1x1x16x16xf32>
    %17 = vector.shape_cast %16 : vector<1x1x16x16xf32> to vector<1x16x16xf32>
    %18 = arith.addf %12, %17 : vector<1x16x16xf32>
    %c0_24 = arith.constant 0 : index
    %c3_25 = arith.constant 3 : index
    %c0_26 = arith.constant 0 : index
    %c0_27 = arith.constant 0 : index
    %19 = vector.load %arg2[%c0_24, %c3_25, %c0_26, %c0_27] : memref<1x4x16x16xf32, #tpu.memory_space<vmem>>, vector<1x1x16x16xf32>
    %20 = vector.shape_cast %19 : vector<1x1x16x16xf32> to vector<1x16x16xf32>
    %21 = arith.addf %15, %20 : vector<1x16x16xf32>
    %cst = arith.constant 2.500000e-01 : f32
    %22 = vector.broadcast %cst : f32 to vector<1x16x16xf32>
    %23 = arith.mulf %18, %22 : vector<1x16x16xf32>
    %cst_28 = arith.constant 2.500000e-01 : f32
    %24 = vector.broadcast %cst_28 : f32 to vector<1x16x16xf32>
    %25 = arith.mulf %21, %24 : vector<1x16x16xf32>
    %26 = tpu.concatenate %23, %25 in 0 : vector<1x16x16xf32>, vector<1x16x16xf32> -> vector<2x16x16xf32>
    %cst_29 = arith.constant 0.000000e+00 : f32
    %27 = vector.broadcast %cst_29 : f32 to vector<2x1x16xf32>
    %cst_30 = arith.constant 0.000000e+00 : f32
    %28 = vector.broadcast %cst_30 : f32 to vector<2x16x1xf32>
    %29 = vector.extract_strided_slice %26 {offsets = [0, 1, 0], sizes = [2, 15, 16], strides = [1, 1, 1]} : vector<2x16x16xf32> to vector<2x15x16xf32>
    %30 = tpu.concatenate %29, %27 in 1 : vector<2x15x16xf32>, vector<2x1x16xf32> -> vector<2x16x16xf32>
    %31 = vector.extract_strided_slice %26 {offsets = [0, 0, 0], sizes = [2, 15, 16], strides = [1, 1, 1]} : vector<2x16x16xf32> to vector<2x15x16xf32>
    %32 = tpu.concatenate %27, %31 in 1 : vector<2x1x16xf32>, vector<2x15x16xf32> -> vector<2x16x16xf32>
    %cst_31 = arith.constant 2.000000e+00 : f32
    %33 = vector.broadcast %cst_31 : f32 to vector<2x16x16xf32>
    %34 = arith.mulf %33, %26 : vector<2x16x16xf32>
    %35 = arith.addf %32, %34 : vector<2x16x16xf32>
    %36 = arith.addf %35, %30 : vector<2x16x16xf32>
    %37 = arith.subf %30, %32 : vector<2x16x16xf32>
    %cst_32 = arith.constant 2.000000e+00 : f32
    %38 = vector.broadcast %cst_32 : f32 to vector<2x16x16xf32>
    %39 = arith.mulf %38, %26 : vector<2x16x16xf32>
    %40 = arith.subf %39, %32 : vector<2x16x16xf32>
    %41 = arith.subf %40, %30 : vector<2x16x16xf32>
    %42 = vector.extract_strided_slice %36 {offsets = [0, 0, 1], sizes = [2, 16, 15], strides = [1, 1, 1]} : vector<2x16x16xf32> to vector<2x16x15xf32>
    %43 = tpu.concatenate %42, %28 in 2 : vector<2x16x15xf32>, vector<2x16x1xf32> -> vector<2x16x16xf32>
    %44 = vector.extract_strided_slice %36 {offsets = [0, 0, 0], sizes = [2, 16, 15], strides = [1, 1, 1]} : vector<2x16x16xf32> to vector<2x16x15xf32>
    %45 = tpu.concatenate %28, %44 in 2 : vector<2x16x1xf32>, vector<2x16x15xf32> -> vector<2x16x16xf32>
    %46 = arith.subf %43, %45 : vector<2x16x16xf32>
    %47 = vector.extract_strided_slice %37 {offsets = [0, 0, 0], sizes = [2, 16, 15], strides = [1, 1, 1]} : vector<2x16x16xf32> to vector<2x16x15xf32>
    %48 = tpu.concatenate %28, %47 in 2 : vector<2x16x1xf32>, vector<2x16x15xf32> -> vector<2x16x16xf32>
    %cst_33 = arith.constant 2.000000e+00 : f32
    %49 = vector.broadcast %cst_33 : f32 to vector<2x16x16xf32>
    %50 = arith.mulf %49, %37 : vector<2x16x16xf32>
    %51 = arith.addf %48, %50 : vector<2x16x16xf32>
    %52 = vector.extract_strided_slice %37 {offsets = [0, 0, 1], sizes = [2, 16, 15], strides = [1, 1, 1]} : vector<2x16x16xf32> to vector<2x16x15xf32>
    %53 = tpu.concatenate %52, %28 in 2 : vector<2x16x15xf32>, vector<2x16x1xf32> -> vector<2x16x16xf32>
    %54 = arith.addf %51, %53 : vector<2x16x16xf32>
    %cst_34 = arith.constant 2.000000e+00 : f32
    %55 = vector.broadcast %cst_34 : f32 to vector<2x16x16xf32>
    %56 = arith.mulf %55, %26 : vector<2x16x16xf32>
    %57 = arith.addf %41, %56 : vector<2x16x16xf32>
    %58 = vector.extract_strided_slice %26 {offsets = [0, 0, 0], sizes = [2, 16, 15], strides = [1, 1, 1]} : vector<2x16x16xf32> to vector<2x16x15xf32>
    %59 = tpu.concatenate %28, %58 in 2 : vector<2x16x1xf32>, vector<2x16x15xf32> -> vector<2x16x16xf32>
    %60 = arith.subf %57, %59 : vector<2x16x16xf32>
    %61 = vector.extract_strided_slice %26 {offsets = [0, 0, 1], sizes = [2, 16, 15], strides = [1, 1, 1]} : vector<2x16x16xf32> to vector<2x16x15xf32>
    %62 = tpu.concatenate %61, %28 in 2 : vector<2x16x15xf32>, vector<2x16x1xf32> -> vector<2x16x16xf32>
    %63 = arith.subf %60, %62 : vector<2x16x16xf32>
    %64 = arith.mulf %46, %46 : vector<2x16x16xf32>
    %65 = arith.mulf %54, %54 : vector<2x16x16xf32>
    %66 = arith.addf %64, %65 : vector<2x16x16xf32>
    %67 = math.sqrt %66 : vector<2x16x16xf32>
    %68 = math.absf %63 : vector<2x16x16xf32>
    %69 = vector.extract_strided_slice %67 {offsets = [0, 0, 0], sizes = [1, 16, 16], strides = [1, 1, 1]} : vector<2x16x16xf32> to vector<1x16x16xf32>
    %70 = vector.extract_strided_slice %67 {offsets = [1, 0, 0], sizes = [1, 16, 16], strides = [1, 1, 1]} : vector<2x16x16xf32> to vector<1x16x16xf32>
    %71 = arith.subf %69, %70 : vector<1x16x16xf32>
    %72 = math.absf %71 : vector<1x16x16xf32>
    %73 = vector.extract_strided_slice %68 {offsets = [0, 0, 0], sizes = [1, 16, 16], strides = [1, 1, 1]} : vector<2x16x16xf32> to vector<1x16x16xf32>
    %74 = vector.extract_strided_slice %68 {offsets = [1, 0, 0], sizes = [1, 16, 16], strides = [1, 1, 1]} : vector<2x16x16xf32> to vector<1x16x16xf32>
    %75 = arith.subf %73, %74 : vector<1x16x16xf32>
    %76 = math.absf %75 : vector<1x16x16xf32>
    %cst_35 = arith.constant dense<0.000000e+00> : vector<16x16xf32>
    %77 = vector.multi_reduction <add>, %72, %cst_35 [0] : vector<1x16x16xf32> to vector<16x16xf32>
    %cst_36 = arith.constant dense<0.000000e+00> : vector<16xf32>
    %78 = vector.multi_reduction <add>, %77, %cst_36 [1] : vector<16x16xf32> to vector<16xf32>
    %79 = vector.shape_cast %78 : vector<16xf32> to vector<16x1xf32>
    %cst_37 = arith.constant dense<0.000000e+00> : vector<1xf32>
    %80 = vector.multi_reduction <add>, %79, %cst_37 [0] : vector<16x1xf32> to vector<1xf32>
    %81 = vector.shape_cast %80 : vector<1xf32> to vector<1x1xf32>
    %cst_38 = arith.constant 1.000000e+00 : f32
    %82 = vector.broadcast %cst_38 : f32 to vector<1x1xf32>
    %83 = arith.mulf %82, %81 : vector<1x1xf32>
    %cst_39 = arith.constant dense<0.000000e+00> : vector<16x16xf32>
    %84 = vector.multi_reduction <add>, %76, %cst_39 [0] : vector<1x16x16xf32> to vector<16x16xf32>
    %cst_40 = arith.constant dense<0.000000e+00> : vector<16xf32>
    %85 = vector.multi_reduction <add>, %84, %cst_40 [1] : vector<16x16xf32> to vector<16xf32>
    %86 = vector.shape_cast %85 : vector<16xf32> to vector<16x1xf32>
    %cst_41 = arith.constant dense<0.000000e+00> : vector<1xf32>
    %87 = vector.multi_reduction <add>, %86, %cst_41 [0] : vector<16x1xf32> to vector<1xf32>
    %88 = vector.shape_cast %87 : vector<1xf32> to vector<1x1xf32>
    %cst_42 = arith.constant 5.000000e-01 : f32
    %89 = vector.broadcast %cst_42 : f32 to vector<1x1xf32>
    %90 = arith.mulf %89, %88 : vector<1x1xf32>
    %91 = arith.addf %83, %90 : vector<1x1xf32>
    %c0_43 = arith.constant 0 : index
    %c0_44 = arith.constant 0 : index
    %c0_45 = arith.constant 0 : index
    %92 = vector.load %arg3[%c0_43, %c0_44, %c0_45] : memref<1x1x1xf32, #tpu.memory_space<vmem>>, vector<1x1x1xf32>
    %93 = vector.shape_cast %92 : vector<1x1x1xf32> to vector<1x1xf32>
    %94 = vector.shape_cast %91 : vector<1x1xf32> to vector<1x1x1xf32>
    tpu.vector_store %arg3[%c0_43, %c0_44, %c0_45], %94 {strides = array<i32>} : memref<1x1x1xf32, #tpu.memory_space<vmem>>, vector<1x1x1xf32>,
    return
  }
  func.func @transform_0(%arg0: i32) -> (i32, i32, i32, i32) {
    %c0_i32 = arith.constant 0 : i32
    %c0_i32_0 = arith.constant 0 : i32
    %c0_i32_1 = arith.constant 0 : i32
    %c0_i32_2 = arith.constant 0 : i32
    return %arg0, %c0_i32, %c0_i32_0, %c0_i32_1 : i32, i32, i32, i32
  }
  func.func @transform_1(%arg0: i32) -> (i32, i32, i32, i32) {
    %c0_i32 = arith.constant 0 : i32
    %c0_i32_0 = arith.constant 0 : i32
    %c0_i32_1 = arith.constant 0 : i32
    %c0_i32_2 = arith.constant 0 : i32
    return %arg0, %c0_i32, %c0_i32_0, %c0_i32_1 : i32, i32, i32, i32
  }
  func.func @transform_2(%arg0: i32) -> (i32, i32, i32) {
    %c0_i32 = arith.constant 0 : i32
    %c0_i32_0 = arith.constant 0 : i32
    %c0_i32_1 = arith.constant 0 : i32
    return %arg0, %c0_i32, %c0_i32_0 : i32, i32, i32
  }
}

</mosaic_0001>

<llo_original>
// kernel: tpu_custom_call.1
$region0: #{tpu_custom_call.1}
  #allocation0 [shape = 'u32[]', space=smem, size = 0x4, offset = 0x4, fixed_abs, tag = 'smem constant byte address 0x4 - core index']
  #allocation1 [shape = 'u32[144,128]{1,0:T(1,128)}', space=vmem, size = 0x12000, scoped, tag = 'internal scratch']
  %s0 = inlined_call_operand.hbm [shape: f32[2,4,16,16], index: 0, kind: input, shape index: {}]
  %s1 = inlined_call_operand.hbm [shape: f32[2,4,16,16], index: 1, kind: input, shape index: {}]
  %s2 = inlined_call_operand.vmem [shape: f32[2,1,1], index: 2, kind: output, shape index: {}]
  %s3 = sld [smem:[#allocation0]]
  $region49: #{tpu_custom_call.1} parent=0
    _
  %s5 = ssub.s32 1, %s3
  %s6 = scalar_select 0, %s5, %s3
  $region1: #{tpu_custom_call.1} parent=0
    #allocation2 [shape = 'u8[65536]{0}', space=vmem, size = 0x10000, scoped, tag = 'input window, operand 0']
    #allocation3 [shape = 's32[2]{0}', space=sflag, size = 0x8, scoped, tag = 'scoped memory for tpu_custom_call.1']
    #allocation4 [shape = 'u8[65536]{0}', space=vmem, size = 0x10000, scoped, tag = 'input window, operand 1']
    #allocation5 [shape = 's32[2]{0}', space=sflag, size = 0x8, scoped, tag = 'scoped memory for tpu_custom_call.1']
    %7 = vsyncpa [#allocation3], 0
    %s8 = scalar_lea.sflag [#allocation3], 1
    %9 = vsyncpa %s8, 0
    %10 = vsyncpa [#allocation5], 0
    %s11 = scalar_lea.sflag [#allocation5], 1
    %12 = vsyncpa %s11, 0
    loop: start=0, step=1, limit=4
    $region2: #{tpu_custom_call.1} parent=1 // loop_pre_header
      _
    $region3: #{tpu_custom_call.1} parent=1 // loop_header
      %s14 = sphi 0, %s18
      %p15 = scmp.ge.s32.totalorder %s14, 4
      %s24 = sphi 0, %s26
      %s27 = sphi 0, %s24
      %s28 = sphi 0, %s27
      %s44 = sphi 0, %s28
      %s50 = sphi 0, %s52
      %s53 = sphi 0, %s50
      %s54 = sphi 0, %s53
      %s70 = sphi 0, %s54
      %s76 = sphi 0, %s78
      %s79 = sphi 0, %s76
      %s80 = sphi 0, %s79
      %s96 = sphi 0, %s80
    $region4: #{tpu_custom_call.1} parent=1 // loop_header_branch
      %17 = sbr.rel (%p15) target = $region8
    $region5: #{tpu_custom_call.1} parent=1 // loop_body
      %s19 = ssub.s32 %s14, 1
      %s20 = ssub.s32 %s14, 2
      %s21 = sadd.s32 %s14, 1
      %s22 = ssub.s32 %s14, %s21
      %p23 = scmp.eq.s32.totalorder %s22, 0
      %s25 = sadd.s32 %s24, 1
      %s26 = scalar_select %p23, %s24, %s25
      %p29 = pneg %p23
      %p30 = scmp.eq.s32.totalorder %s14, 1
      %p31 = por %p29, %p30
      %p32 = scmp.ne.s32.totalorder %s24, %s27
      %p33 = scmp.eq.s32.totalorder %s14, 0
      %p34 = por %p32, %p33
      %p35 = scmp.ne.s32.totalorder %s24, %s27
      %p36 = scmp.eq.s32.totalorder %s19, 1
      %p37 = por %p35, %p36
      %p38 = scmp.ne.s32.totalorder %s27, %s28
      %p39 = scmp.eq.s32.totalorder %s19, 0
      %p40 = por %p38, %p39
      %p41 = scmp.ne.s32.totalorder %s27, %s28
      %p42 = scmp.eq.s32.totalorder %s20, 1
      %p43 = por %p41, %p42
      %p45 = scmp.ne.s32.totalorder %s28, %s44
      %p46 = scmp.eq.s32.totalorder %s20, 0
      %p47 = por %p45, %p46
      %s48 = ssub.s32 %s14, %s21
      %p49 = scmp.eq.s32.totalorder %s48, 0
      %s51 = sadd.s32 %s50, 1
      %s52 = scalar_select %p49, %s50, %s51
      %p55 = pneg %p49
      %p56 = scmp.eq.s32.totalorder %s14, 1
      %p57 = por %p55, %p56
      %p58 = scmp.ne.s32.totalorder %s50, %s53
      %p59 = scmp.eq.s32.totalorder %s14, 0
      %p60 = por %p58, %p59
      %p61 = scmp.ne.s32.totalorder %s50, %s53
      %p62 = scmp.eq.s32.totalorder %s19, 1
      %p63 = por %p61, %p62
      %p64 = scmp.ne.s32.totalorder %s53, %s54
      %p65 = scmp.eq.s32.totalorder %s19, 0
      %p66 = por %p64, %p65
      %p67 = scmp.ne.s32.totalorder %s53, %s54
      %p68 = scmp.eq.s32.totalorder %s20, 1
      %p69 = por %p67, %p68
      %p71 = scmp.ne.s32.totalorder %s54, %s70
      %p72 = scmp.eq.s32.totalorder %s20, 0
      %p73 = por %p71, %p72
      %s74 = ssub.s32 %s14, %s21
      %p75 = scmp.eq.s32.totalorder %s74, 0
      %s77 = sadd.s32 %s76, 1
      %s78 = scalar_select %p75, %s76, %s77
      %p81 = pneg %p75
      %p82 = scmp.eq.s32.totalorder %s14, 1
      %p83 = por %p81, %p82
      %p84 = scmp.ne.s32.totalorder %s76, %s79
      %p85 = scmp.eq.s32.totalorder %s14, 0
      %p86 = por %p84, %p85
      %p87 = scmp.ne.s32.totalorder %s76, %s79
      %p88 = scmp.eq.s32.totalorder %s19, 1
      %p89 = por %p87, %p88
      %p90 = scmp.ne.s32.totalorder %s79, %s80
      %p91 = scmp.eq.s32.totalorder %s19, 0
      %p92 = por %p90, %p91
      %p93 = scmp.ne.s32.totalorder %s79, %s80
      %p94 = scmp.eq.s32.totalorder %s20, 1
      %p95 = por %p93, %p94
      %p97 = scmp.ne.s32.totalorder %s80, %s96
      %p98 = scmp.eq.s32.totalorder %s20, 0
      %p99 = por %p97, %p98
      %p100 = scmp.le.s32.totalorder 1, %s14
      %p101 = scmp.lt.s32.totalorder %s14, 3
      %p102 = pnand %p100, %p101
      %p103 = pneg %p102
      // Predicated region
      $region9: #{tpu_custom_call.1} parent=5 // pred_check
        _
      $region10: #{tpu_custom_call.1} parent=5 // pred_check_branch
        %105 = sbr.rel (%p102) target = $region12
      $region11: #{tpu_custom_call.1} parent=5 // pred_region
        %s106 = ssub.s32 %s14, 1
      $region12: #{tpu_custom_call.1} parent=5 // pred_fallthru
        _
      %p107 = scmp.lt.s32.totalorder %s14, 2
      // Predicated region
      $region13: #{tpu_custom_call.1} parent=5 // pred_check
        %p108 = pneg %p107
      $region14: #{tpu_custom_call.1} parent=5 // pred_check_branch
        %110 = sbr.rel (%p108) target = $region16
      $region15: #{tpu_custom_call.1} parent=5 // pred_region
        // Predicated region
        $region17: #{tpu_custom_call.1} parent=15 // pred_check
          %p111 = pneg %p34
        $region18: #{tpu_custom_call.1} parent=15 // pred_check_branch
          %113 = sbr.rel (%p111) target = $region20
        $region19: #{tpu_custom_call.1} parent=15 // pred_region
          %s114 = sand.u32 %s24, 1
          %s115 = scalar_lea.sflag [#allocation3], %s114
          %s116 = sand.u32 %s24, 1
          %s117 = smul.addr %s116, 64
          %s118 = scalar_lea.vmem [#allocation2], %s117
          %s120 = ssub.s32 1024, 1024
          %121 = vsyncadd %s115, %s120
          %s122 = smul.addr %s14, 8
          %s123 = smul.addr %s122, 128
          %s124 = scalar_lea.hbm %s0, %s123
          %s125 = sshll.u32 %s118, 4
          %s126 = int_to_ptr.vmem [resolvable:$true] %s125
          %131 = dma.hbm_to_vmem [thread:$0]  %s124, 1024, %s126, %s115, 128, 128, 8
        $region20: #{tpu_custom_call.1} parent=15 // pred_fallthru
          _
        // Predicated region
        $region21: #{tpu_custom_call.1} parent=15 // pred_check
          %p132 = pneg %p60
        $region22: #{tpu_custom_call.1} parent=15 // pred_check_branch
          %134 = sbr.rel (%p132) target = $region24
        $region23: #{tpu_custom_call.1} parent=15 // pred_region
          %s135 = sand.u32 %s50, 1
          %s136 = scalar_lea.sflag [#allocation5], %s135
          %s137 = sand.u32 %s50, 1
          %s138 = smul.addr %s137, 64
          %s139 = scalar_lea.vmem [#allocation4], %s138
          %s141 = ssub.s32 1024, 1024
          %142 = vsyncadd %s136, %s141
          %s143 = smul.addr %s14, 8
          %s144 = smul.addr %s143, 128
          %s145 = scalar_lea.hbm %s1, %s144
          %s146 = sshll.u32 %s139, 4
          %s147 = int_to_ptr.vmem [resolvable:$true] %s146
          %152 = dma.hbm_to_vmem [thread:$0]  %s145, 1024, %s147, %s136, 128, 128, 8
        $region24: #{tpu_custom_call.1} parent=15 // pred_fallthru
          _
      $region16: #{tpu_custom_call.1} parent=5 // pred_fallthru
        _
      %p153 = scmp.le.s32.totalorder 1, %s14
      %p154 = scmp.lt.s32.totalorder %s14, 3
      %p155 = pnand %p153, %p154
      %p156 = pneg %p155
      // Predicated region
      $region25: #{tpu_custom_call.1} parent=5 // pred_check
        _
      $region26: #{tpu_custom_call.1} parent=5 // pred_check_branch
        %158 = sbr.rel (%p155) target = $region28
      $region27: #{tpu_custom_call.1} parent=5 // pred_region
        %s159 = ssub.s32 %s14, 1
        %s160 = sand.u32 %s27, 1
        %s161 = scalar_lea.sflag [#allocation3], %s160
        %s162 = sand.u32 %s27, 1
        %s163 = smul.addr %s162, 64
        %s164 = scalar_lea.vmem [#allocation2], %s163
        // Predicated region
        $region29: #{tpu_custom_call.1} parent=27 // pred_check
          %p165 = pneg %p40
        $region30: #{tpu_custom_call.1} parent=27 // pred_check_branch
          %167 = sbr.rel (%p165) target = $region32
        $region31: #{tpu_custom_call.1} parent=27 // pred_region
          %168 = dma.done %s161, 1024
        $region32: #{tpu_custom_call.1} parent=27 // pred_fallthru
          _
        %s169 = sand.u32 %s53, 1
        %s170 = scalar_lea.sflag [#allocation5], %s169
        %s171 = sand.u32 %s53, 1
        %s172 = smul.addr %s171, 64
        %s173 = scalar_lea.vmem [#allocation4], %s172
        // Predicated region
        $region33: #{tpu_custom_call.1} parent=27 // pred_check
          %p174 = pneg %p66
        $region34: #{tpu_custom_call.1} parent=27 // pred_check_branch
          %176 = sbr.rel (%p174) target = $region36
        $region35: #{tpu_custom_call.1} parent=27 // pred_region
          %177 = dma.done %s170, 1024
        $region36: #{tpu_custom_call.1} parent=27 // pred_fallthru
          _
        %s178 = sand.u32 %s27, 1
        %s179 = scalar_lea.sflag [#allocation3], %s178
        %s180 = sand.u32 %s27, 1
        %s181 = smul.addr %s180, 64
        %s182 = scalar_lea.vmem [#allocation2], %s181
        %p183 = pneg %p40
        %p184 = pneg %p37
        %s185 = sand.u32 %s53, 1
        %s186 = scalar_lea.sflag [#allocation5], %s185
        %s187 = sand.u32 %s53, 1
        %s188 = smul.addr %s187, 64
        %s189 = scalar_lea.vmem [#allocation4], %s188
        %p190 = pneg %p66
        %p191 = pneg %p63
        %p192 = pneg %p92
        %p193 = pneg %p89
        %p194 = scmp.lt.s32.totalorder %s19, 1
        %s195 = scalar_select %p194, %s19, 1
        %s196 = scalar_lea.vmem %s2, %s195
        %p197 = scmp.lt.s32.totalorder %s19, 1
        %s198 = scalar_select %p197, %s19, 1
        %s199 = scalar_lea.vmem %s2, %s198
        %v200 = vld [vmem:[%s164] sm:$0xff]
        %v201 = vld [vmem:[%s164 + $0x8] sm:$0xff]
        %v202 = vld [vmem:[%s173] sm:$0xff]
        %v203 = vld [vmem:[%s173 + $0x8] sm:$0xff]
        %s204 = scalar_lea.vmem %s164, 16 [#allocation2]
        %v205 = vld [vmem:[%s204] sm:$0xff]
        %v206 = vld [vmem:[%s204 + $0x8] sm:$0xff]
        %v207 = vadd.f32 %v200, %v205
        %v208 = vadd.f32 %v201, %v206
        %s209 = scalar_lea.vmem %s173, 16 [#allocation4]
        %v210 = vld [vmem:[%s209] sm:$0xff]
        %v211 = vld [vmem:[%s209 + $0x8] sm:$0xff]
        %v212 = vadd.f32 %v202, %v210
        %v213 = vadd.f32 %v203, %v211
        %s214 = scalar_lea.vmem %s164, 32 [#allocation2]
        %v215 = vld [vmem:[%s214] sm:$0xff]
        %v216 = vld [vmem:[%s214 + $0x8] sm:$0xff]
        %v217 = vadd.f32 %v207, %v215
        %v218 = vadd.f32 %v208, %v216
        %s219 = scalar_lea.vmem %s173, 32 [#allocation4]
        %v220 = vld [vmem:[%s219] sm:$0xff]
        %v221 = vld [vmem:[%s219 + $0x8] sm:$0xff]
        %v222 = vadd.f32 %v212, %v220
        %v223 = vadd.f32 %v213, %v221
        %s224 = scalar_lea.vmem %s164, 48 [#allocation2]
        %v225 = vld [vmem:[%s224] sm:$0xff]
        %v226 = vld [vmem:[%s224 + $0x8] sm:$0xff]
        %v227 = vadd.f32 %v217, %v225
        %v228 = vadd.f32 %v218, %v226
        %s229 = scalar_lea.vmem %s173, 48 [#allocation4]
        %v230 = vld [vmem:[%s229] sm:$0xff]
        %v231 = vld [vmem:[%s229 + $0x8] sm:$0xff]
        %v232 = vadd.f32 %v222, %v230
        %v233 = vadd.f32 %v223, %v231
        %v234 = vmul.f32 %v227, 0.25
        %v235 = vmul.f32 %v228, 0.25
        %v236 = vmul.f32 %v232, 0.25
        %v237 = vmul.f32 %v233, 0.25
        %vm242 = vcmask 1046528
        %v243 = vrot.slane %v234, 1
        %v244 = vrot.slane %v235, 1
        %v245 = vsel %vm242, %v243, %v244
        %v246 = vrot.slane %v236, 1
        %v247 = vrot.slane %v237, 1
        %v248 = vsel %vm242, %v246, %v247
        %v253 = vsel %vm242, %v244, 0.0
        %v254 = vsel %vm242, %v247, 0.0
        %vm255 = vcmask 1040384
        %v256 = vrot.slane %v234, 7
        %v257 = vrot.slane %v235, 7
        %v258 = vsel %vm255, %v256, %v257
        %v259 = vrot.slane %v236, 7
        %v260 = vrot.slane %v237, 7
        %v261 = vsel %vm255, %v259, %v260
        %v266 = vsel %vm255, 0.0, %v256
        %v267 = vsel %vm255, 0.0, %v259
        %v268 = vmul.f32 %v234, 2.0
        %v269 = vmul.f32 %v235, 2.0
        %v270 = vmul.f32 %v236, 2.0
        %v271 = vmul.f32 %v237, 2.0
        %v272 = vadd.f32 %v266, %v268
        %v273 = vadd.f32 %v258, %v269
        %v274 = vadd.f32 %v267, %v270
        %v275 = vadd.f32 %v261, %v271
        %v276 = vadd.f32 %v272, %v245
        %v277 = vadd.f32 %v273, %v253
        %v278 = vadd.f32 %v274, %v248
        %v279 = vadd.f32 %v275, %v254
        %v280 = vsub.f32 %v245, %v266
        %v281 = vsub.f32 %v253, %v258
        %v282 = vsub.f32 %v248, %v267
        %v283 = vsub.f32 %v254, %v261
        %v284 = vsub.f32 %v268, %v266
        %v285 = vsub.f32 %v269, %v258
        %v286 = vsub.f32 %v270, %v267
        %v287 = vsub.f32 %v271, %v261
        %v288 = vsub.f32 %v284, %v245
        %v289 = vsub.f32 %v285, %v253
        %v290 = vsub.f32 %v286, %v248
        %v291 = vsub.f32 %v287, %v254
        %296 = vrot.lane.b32.xlu0 %v276, 127
        %v297 = vpop.permute.xlu0 %296
        %298 = vrot.lane.b32.xlu0 %v277, 127
        %v299 = vpop.permute.xlu0 %298
        %300 = vrot.lane.b32.xlu0 %v278, 127
        %v301 = vpop.permute.xlu0 %300
        %302 = vrot.lane.b32.xlu0 %v279, 127
        %v303 = vpop.permute.xlu0 %302
        %vm308 = vcmask 121856
        %v309 = vsel %vm308, %v297, 0.0
        %v310 = vsel %vm308, %v299, 0.0
        %v311 = vsel %vm308, %v301, 0.0
        %v312 = vsel %vm308, %v303, 0.0
        %313 = vrot.lane.b32.xlu0 %v276, 1
        %v314 = vpop.permute.xlu0 %313
        %315 = vrot.lane.b32.xlu0 %v277, 1
        %v316 = vpop.permute.xlu0 %315
        %317 = vrot.lane.b32.xlu0 %v278, 1
        %v318 = vpop.permute.xlu0 %317
        %319 = vrot.lane.b32.xlu0 %v279, 1
        %v320 = vpop.permute.xlu0 %319
        %vm325 = vcmask 7168
        %v326 = vsel %vm325, 0.0, %v314
        %v327 = vsel %vm325, 0.0, %v316
        %v328 = vsel %vm325, 0.0, %v318
        %v329 = vsel %vm325, 0.0, %v320
        %v330 = vsub.f32 %v309, %v326
        %v331 = vsub.f32 %v310, %v327
        %v332 = vsub.f32 %v311, %v328
        %v333 = vsub.f32 %v312, %v329
        %338 = vrot.lane.b32.xlu0 %v280, 1
        %v339 = vpop.permute.xlu0 %338
        %340 = vrot.lane.b32.xlu0 %v281, 1
        %v341 = vpop.permute.xlu0 %340
        %342 = vrot.lane.b32.xlu0 %v282, 1
        %v343 = vpop.permute.xlu0 %342
        %344 = vrot.lane.b32.xlu0 %v283, 1
        %v345 = vpop.permute.xlu0 %344
        %v350 = vsel %vm325, 0.0, %v339
        %v351 = vsel %vm325, 0.0, %v341
        %v352 = vsel %vm325, 0.0, %v343
        %v353 = vsel %vm325, 0.0, %v345
        %v354 = vmul.f32 %v280, 2.0
        %v355 = vmul.f32 %v281, 2.0
        %v356 = vmul.f32 %v282, 2.0
        %v357 = vmul.f32 %v283, 2.0
        %v358 = vadd.f32 %v350, %v354
        %v359 = vadd.f32 %v351, %v355
        %v360 = vadd.f32 %v352, %v356
        %v361 = vadd.f32 %v353, %v357
        %362 = vrot.lane.b32.xlu0 %v280, 127
        %v363 = vpop.permute.xlu0 %362
        %364 = vrot.lane.b32.xlu0 %v281, 127
        %v365 = vpop.permute.xlu0 %364
        %366 = vrot.lane.b32.xlu0 %v282, 127
        %v367 = vpop.permute.xlu0 %366
        %368 = vrot.lane.b32.xlu0 %v283, 127
        %v369 = vpop.permute.xlu0 %368
        %v374 = vsel %vm308, %v363, 0.0
        %v375 = vsel %vm308, %v365, 0.0
        %v376 = vsel %vm308, %v367, 0.0
        %v377 = vsel %vm308, %v369, 0.0
        %v378 = vadd.f32 %v358, %v374
        %v379 = vadd.f32 %v359, %v375
        %v380 = vadd.f32 %v360, %v376
        %v381 = vadd.f32 %v361, %v377
        %v382 = vadd.f32 %v288, %v268
        %v383 = vadd.f32 %v289, %v269
        %v384 = vadd.f32 %v290, %v270
        %v385 = vadd.f32 %v291, %v271
        %386 = vrot.lane.b32.xlu0 %v234, 1
        %v387 = vpop.permute.xlu0 %386
        %388 = vrot.lane.b32.xlu0 %v235, 1
        %v389 = vpop.permute.xlu0 %388
        %390 = vrot.lane.b32.xlu0 %v236, 1
        %v391 = vpop.permute.xlu0 %390
        %392 = vrot.lane.b32.xlu0 %v237, 1
        %v393 = vpop.permute.xlu0 %392
        %v398 = vsel %vm325, 0.0, %v387
        %v399 = vsel %vm325, 0.0, %v389
        %v400 = vsel %vm325, 0.0, %v391
        %v401 = vsel %vm325, 0.0, %v393
        %v402 = vsub.f32 %v382, %v398
        %v403 = vsub.f32 %v383, %v399
        %v404 = vsub.f32 %v384, %v400
        %v405 = vsub.f32 %v385, %v401
        %406 = vrot.lane.b32.xlu0 %v234, 127
        %v407 = vpop.permute.xlu0 %406
        %408 = vrot.lane.b32.xlu0 %v235, 127
        %v409 = vpop.permute.xlu0 %408
        %410 = vrot.lane.b32.xlu0 %v236, 127
        %v411 = vpop.permute.xlu0 %410
        %412 = vrot.lane.b32.xlu0 %v237, 127
        %v413 = vpop.permute.xlu0 %412
        %v418 = vsel %vm308, %v407, 0.0
        %v419 = vsel %vm308, %v409, 0.0
        %v420 = vsel %vm308, %v411, 0.0
        %v421 = vsel %vm308, %v413, 0.0
        %v422 = vsub.f32 %v402, %v418
        %v423 = vsub.f32 %v403, %v419
        %v424 = vsub.f32 %v404, %v420
        %v425 = vsub.f32 %v405, %v421
        %v426 = vmul.f32 %v330, %v330
        %v427 = vmul.f32 %v331, %v331
        %v428 = vmul.f32 %v332, %v332
        %v429 = vmul.f32 %v333, %v333
        %v430 = vmul.f32 %v378, %v378
        %v431 = vmul.f32 %v379, %v379
        %v432 = vmul.f32 %v380, %v380
        %v433 = vmul.f32 %v381, %v381
        %v434 = vadd.f32 %v426, %v430
        %v435 = vadd.f32 %v427, %v431
        %v436 = vadd.f32 %v428, %v432
        %v437 = vadd.f32 %v429, %v433
        %v438 = vrsqrt.pop %v434
        %v439 = vmul.f32 %v434, %v438
        %vm440 = vcmp.eq.f32.partialorder %v434, inf
        %v441 = vsel %vm440, %v434, %v439
        %vm442 = vcmp.eq.f32.partialorder %v434, 0.0
        %v443 = vand.u32 %v434, 2147483648
        %v444 = vsel %vm442, %v443, %v441
        %v445 = vrsqrt.pop %v435
        %v446 = vmul.f32 %v435, %v445
        %vm447 = vcmp.eq.f32.partialorder %v435, inf
        %v448 = vsel %vm447, %v435, %v446
        %vm449 = vcmp.eq.f32.partialorder %v435, 0.0
        %v450 = vand.u32 %v435, 2147483648
        %v451 = vsel %vm449, %v450, %v448
        %v452 = vrsqrt.pop %v436
        %v453 = vmul.f32 %v436, %v452
        %vm454 = vcmp.eq.f32.partialorder %v436, inf
        %v455 = vsel %vm454, %v436, %v453
        %vm456 = vcmp.eq.f32.partialorder %v436, 0.0
        %v457 = vand.u32 %v436, 2147483648
        %v458 = vsel %vm456, %v457, %v455
        %v459 = vrsqrt.pop %v437
        %v460 = vmul.f32 %v437, %v459
        %vm461 = vcmp.eq.f32.partialorder %v437, inf
        %v462 = vsel %vm461, %v437, %v460
        %vm463 = vcmp.eq.f32.partialorder %v437, 0.0
        %v464 = vand.u32 %v437, 2147483648
        %v465 = vsel %vm463, %v464, %v462
        %v466 = vand.u32 2147483647, %v422
        %v467 = vand.u32 2147483647, %v423
        %v468 = vand.u32 2147483647, %v424
        %v469 = vand.u32 2147483647, %v425
        %v470 = vsub.f32 %v444, %v458
        %v471 = vsub.f32 %v451, %v465
        %v472 = vand.u32 2147483647, %v470
        %v473 = vand.u32 2147483647, %v471
        %v474 = vsub.f32 %v466, %v468
        %v475 = vsub.f32 %v467, %v469
        %v476 = vand.u32 2147483647, %v474
        %v477 = vand.u32 2147483647, %v475
        %v478 = vadd.f32 %v472, 0.0
        %v479 = vadd.f32 %v473, 0.0
        %vm480 = vcmask 130048
        %v481 = vsel %vm480, %v478, 0.0
        %482 = vadd.xlane.f32.xlu0 %v481
        %v483 = vpop.xlane.xlu0 %482
        %v484 = vsel %vm480, %v479, 0.0
        %485 = vadd.xlane.f32.xlu0 %v484
        %v486 = vpop.xlane.xlu0 %485
        %v487 = vadd.f32 %v483, %v486
        %v488 = vrot.slane %v487, 4
        %v489 = vadd.f32 %v487, %v488
        %v490 = vrot.slane %v489, 2
        %v491 = vadd.f32 %v489, %v490
        %v492 = vrot.slane %v491, 1
        %v493 = vadd.f32 %v491, %v492
        %v494 = vadd.f32 %v476, 0.0
        %v495 = vadd.f32 %v477, 0.0
        %v496 = vsel %vm480, %v494, 0.0
        %497 = vadd.xlane.f32.xlu0 %v496
        %v498 = vpop.xlane.xlu0 %497
        %v499 = vsel %vm480, %v495, 0.0
        %500 = vadd.xlane.f32.xlu0 %v499
        %v501 = vpop.xlane.xlu0 %500
        %v502 = vadd.f32 %v498, %v501
        %v503 = vrot.slane %v502, 4
        %v504 = vadd.f32 %v502, %v503
        %v505 = vrot.slane %v504, 2
        %v506 = vadd.f32 %v504, %v505
        %v507 = vrot.slane %v506, 1
        %v508 = vadd.f32 %v506, %v507
        %v509 = vmul.f32 %v508, 0.5
        %v510 = vadd.f32 %v493, %v509
        %vm511 = vcmask 0
        %512 = vst.msk [vmem:[%s199] sm:$0x1] %vm511, %v510
        %p513 = scmp.lt.s32.totalorder %s19, 1
        %s514 = scalar_select %p513, %s19, 1
        %s515 = scalar_lea.vmem %s2, %s514
        // Predicated region
        $region37: #{tpu_custom_call.1} parent=27 // pred_check
          %p516 = pneg %p89
        $region38: #{tpu_custom_call.1} parent=27 // pred_check_branch
          %518 = sbr.rel (%p516) target = $region40
        $region39: #{tpu_custom_call.1} parent=27 // pred_region
          _
        $region40: #{tpu_custom_call.1} parent=27 // pred_fallthru
          _
      $region28: #{tpu_custom_call.1} parent=5 // pred_fallthru
        _
      %p519 = scmp.le.s32.totalorder 2, %s14
      // Predicated region
      $region41: #{tpu_custom_call.1} parent=5 // pred_check
        %p520 = pneg %p519
      $region42: #{tpu_custom_call.1} parent=5 // pred_check_branch
        %522 = sbr.rel (%p520) target = $region44
      $region43: #{tpu_custom_call.1} parent=5 // pred_region
        %s523 = ssub.s32 %s14, 2
        // Predicated region
        $region45: #{tpu_custom_call.1} parent=43 // pred_check
          %p524 = pneg %p95
        $region46: #{tpu_custom_call.1} parent=43 // pred_check_branch
          %526 = sbr.rel (%p524) target = $region48
        $region47: #{tpu_custom_call.1} parent=43 // pred_region
          %p527 = scmp.lt.s32.totalorder %s20, 1
          %s528 = scalar_select %p527, %s20, 1
          %s529 = scalar_lea.vmem %s2, %s528
        $region48: #{tpu_custom_call.1} parent=43 // pred_fallthru
          _
      $region44: #{tpu_custom_call.1} parent=5 // pred_fallthru
        _
    $region6: #{tpu_custom_call.1} parent=1 // loop_footer
      %s18 = sadd.s32 1, %s14
    $region7: #{tpu_custom_call.1} parent=1 // loop_footer_branch
      %13 = sbr.rel target = $region3
    $region8: #{tpu_custom_call.1} parent=1 // loop_exit
      _
    %530 = vsyncpa [#allocation3], 1
    %s531 = scalar_lea.sflag [#allocation3], 1
    %532 = vsyncpa %s531, 1
    %533 = vsyncpa [#allocation5], 1
    %s534 = scalar_lea.sflag [#allocation5], 1
    %535 = vsyncpa %s534, 1

</llo_original>
